<compile_context>
chip_gen: v6e
topology: v6e:2x2x1
jax: 0.10.0
libtpu: 0.0.40
codegen_flags: <defaults>
</compile_context>

<pallas_src>
import functools

import jax
import jax.numpy as jnp
from jax.experimental import pallas as pl
from jax.experimental.pallas import tpu as pltpu

_LANE = 128
_SUBLANE = 8
_ROW_ELEMS = _LANE * _SUBLANE           # pad HW to a multiple of 1024 elements
_STEP_BUDGET_BYTES = 14 * 1024 * 1024   # full per-step VMEM footprint target
_VMEM_LIMIT_BYTES = 32 * 1024 * 1024    # safe on v5e/v6e (128 MiB) and v7x (64 MiB/TC)
_MIN_PARALLEL_CELLS = 4                 # keep >=4 grid cells when work is non-trivial


def _bytes_per_row(C, in_item, out_item, gt_item):
    """VMEM bytes per (batch, 128-lane spatial row).

    Counts the double-buffered native-dtype input blocks plus a generous
    allowance for the f32 intermediates the kernel materializes
    (cast x, |x-0.5|, w, broadcast w, cast out/gt, diff, diff*w).
    """
    native = (C * in_item + 3 * out_item + 3 * gt_item) * _LANE * 2
    interm = (2 * C + 17) * _LANE * 4
    return native + interm


def _choose_tiles(N, C, R, in_item, out_item, gt_item):
    """Pick (Bt, S): batch fold and spatial-row tile (multiple of 8, divides R)."""
    row_bytes = _bytes_per_row(C, in_item, out_item, gt_item)
    max_rows = max(_SUBLANE, _STEP_BUDGET_BYTES // row_bytes)

    # Guarantee several grid cells when the input is non-trivial so both v7x
    # TensorCores are used and the pipeline overlaps DMA with compute.
    total_rows = N * R
    if total_rows >= _MIN_PARALLEL_CELLS * _SUBLANE:
        max_rows = min(max_rows, max(_SUBLANE, total_rows // _MIN_PARALLEL_CELLS))

    if R <= max_rows:
        # Whole spatial extent per batch fits; fold batch elements into one block.
        S = R
        Bt = max(1, min(N, max_rows // R))
        while N % Bt != 0:
            Bt -= 1
    else:
        # Tile the spatial-row axis; R is a multiple of 8, so S=8 always divides.
        Bt = 1
        S = min(R, (max_rows // _SUBLANE) * _SUBLANE)
        while R % S != 0:
            S -= _SUBLANE
    return Bt, S


def _weighted_l1_kernel(in_ref, out_ref, gt_ref, part_ref, *, inv_c2):
    """One (batch-block, spatial-tile) grid cell -> one (8,128) partial block.

    in_ref  : (Bt, C, S, 128)   native dtype
    out_ref : (Bt, 3, S, 128)   native dtype
    gt_ref  : (Bt, 3, S, 128)   native dtype
    part_ref: (1, 1, 8, 128)    f32 lane-dense partial-sum block
    """
    x = in_ref[...].astype(jnp.float32)                       # (Bt, C, S, 128)
    # mean_c((|x_c-0.5| + 0.1) / 0.5) == sum_c|x_c-0.5| * (2/C) + 0.2
    w = jnp.sum(jnp.abs(x - 0.5), axis=1, keepdims=True) * inv_c2 + 0.2
    diff = jnp.abs(out_ref[...].astype(jnp.float32)
                   - gt_ref[...].astype(jnp.float32))          # (Bt, 3, S, 128)
    wd = diff * w                                              # broadcast over 3 ch
    # Tree-add all leading axes down to one (8,128) block: pure VPU adds over
    # vregs, no cross-lane/cross-sublane (XLU) reduction, unmasked dense store.
    part_ref[0, 0] = jnp.sum(wd.reshape(-1, _SUBLANE, _LANE), axis=0)


def weighted_l1_loss(inp, out, gt):
    """Pallas TPU implementation of WeightedL1Loss.forward.

    inp: (N, C, H, W)   out/gt: (N, 3, H, W)   returns scalar f32 mean loss.
    """
    N, C, H, W = inp.shape
    assert out.shape == (N, 3, H, W) and gt.shape == (N, 3, H, W)
    HW = H * W
    HW_pad = ((HW + _ROW_ELEMS - 1) // _ROW_ELEMS) * _ROW_ELEMS
    pad = HW_pad - HW
    R = HW_pad // _LANE                                        # multiple of 8

    def _prep(a, ch):
        a = a.reshape(N, ch, HW)
        if pad:
            # Zero padding: |out-gt| == 0 there, so padded positions contribute 0.
            a = jnp.pad(a, ((0, 0), (0, 0), (0, pad)))
        return a.reshape(N, ch, R, _LANE)

    inp_r = _prep(inp, C)
    out_r = _prep(out, 3)
    gt_r = _prep(gt, 3)

    Bt, S = _choose_tiles(N, C, R, inp.dtype.itemsize,
                          out.dtype.itemsize, gt.dtype.itemsize)
    g_b, g_s = N // Bt, R // S

    kernel = functools.partial(_weighted_l1_kernel, inv_c2=2.0 / C)
    partials = pl.pallas_call(
        kernel,
        out_shape=jax.ShapeDtypeStruct((g_b, g_s, _SUBLANE, _LANE), jnp.float32),
        grid_spec=pltpu.PrefetchScalarGridSpec(
            num_scalar_prefetch=0,
            grid=(g_b, g_s),
            in_specs=[
                pl.BlockSpec((Bt, C, S, _LANE), lambda i, j: (i, 0, j, 0)),
                pl.BlockSpec((Bt, 3, S, _LANE), lambda i, j: (i, 0, j, 0)),
                pl.BlockSpec((Bt, 3, S, _LANE), lambda i, j: (i, 0, j, 0)),
            ],
            out_specs=pl.BlockSpec((1, 1, _SUBLANE, _LANE),
                                   lambda i, j: (i, j, 0, 0)),
        ),
        compiler_params=pltpu.CompilerParams(
            dimension_semantics=("parallel", "parallel"),
            vmem_limit_bytes=_VMEM_LIMIT_BYTES,
        ),
    )(inp_r, out_r, gt_r)

    # Sum every cell's (8,128) partial block, then normalize by the ORIGINAL
    # element count (padding contributed zeros).
    return jnp.sum(partials) / jnp.float32(N * 3 * H * W)


def _reference(inp, out, gt):
    bias = 0.1
    w = (jnp.abs(inp.astype(jnp.float32) - 0.5) + bias) / 0.5
    w = jnp.mean(w, axis=1, keepdims=True)          # (N,1,H,W)
    w = jnp.broadcast_to(w, out.shape)              # repeat(1,3,1,1)
    return jnp.mean(jnp.abs(out.astype(jnp.float32)
                            - gt.astype(jnp.float32)) * w)


if __name__ == "__main__":
    key = jax.random.PRNGKey(0)
    k1, k2, k3 = jax.random.split(key, 3)
    N, C, H, W = 2, 4, 16, 16
    inp = jax.random.uniform(k1, (N, C, H, W), dtype=jnp.float32)
    out = jax.random.normal(k2, (N, 3, H, W), dtype=jnp.float32)
    gt = jax.random.normal(k3, (N, 3, H, W), dtype=jnp.float32)

    loss = jax.block_until_ready(weighted_l1_loss(inp, out, gt))
    ref = jax.block_until_ready(_reference(inp, out, gt))
    assert jnp.allclose(loss, ref, rtol=1e-5, atol=1e-6), (loss, ref)
    print("KERNEL_OK")
</pallas_src>

<mosaic_0001>
module attributes {stable_mosaic.version = 11 : i64} {
  func.func @_weighted_l1_kernel(%arg0: i32, %arg1: i32, %arg2: memref<2x4x8x128xf32, #tpu.memory_space<vmem>>, %arg3: memref<2x3x8x128xf32, #tpu.memory_space<vmem>>, %arg4: memref<2x3x8x128xf32, #tpu.memory_space<vmem>>, %arg5: memref<1x1x8x128xf32, #tpu.memory_space<vmem>>) attributes {dimension_semantics = [#tpu.dimension_semantics<parallel>, #tpu.dimension_semantics<parallel>], iteration_bounds = array<i64: 1, 1>, scalar_prefetch = 0 : i64, scratch_operands = 0 : i64, tpu.core_type = #tpu.core_type<tc>, window_params = [{transform_indices = @transform_0, window_bounds = array<i64: 2, 4, 8, 128>}, {transform_indices = @transform_1, window_bounds = array<i64: 2, 3, 8, 128>}, {transform_indices = @transform_2, window_bounds = array<i64: 2, 3, 8, 128>}, {transform_indices = @transform_3, window_bounds = array<i64: 1, 1, 8, 128>}]} {
    %c0 = arith.constant 0 : index
    %c0_0 = arith.constant 0 : index
    %c0_1 = arith.constant 0 : index
    %c0_2 = arith.constant 0 : index
    %0 = vector.load %arg2[%c0, %c0_0, %c0_1, %c0_2] : memref<2x4x8x128xf32, #tpu.memory_space<vmem>>, vector<2x4x8x128xf32>
    %cst = arith.constant 5.000000e-01 : f32
    %1 = vector.broadcast %cst : f32 to vector<2x4x8x128xf32>
    %2 = arith.subf %0, %1 : vector<2x4x8x128xf32>
    %3 = math.absf %2 : vector<2x4x8x128xf32>
    %cst_3 = arith.constant dense<0.000000e+00> : vector<2x8x128xf32>
    %4 = vector.multi_reduction <add>, %3, %cst_3 [1] : vector<2x4x8x128xf32> to vector<2x8x128xf32>
    %5 = vector.shape_cast %4 : vector<2x8x128xf32> to vector<2x1x8x128xf32>
    %cst_4 = arith.constant 5.000000e-01 : f32
    %6 = vector.broadcast %cst_4 : f32 to vector<2x1x8x128xf32>
    %7 = arith.mulf %5, %6 : vector<2x1x8x128xf32>
    %cst_5 = arith.constant 2.000000e-01 : f32
    %8 = vector.broadcast %cst_5 : f32 to vector<2x1x8x128xf32>
    %9 = arith.addf %7, %8 : vector<2x1x8x128xf32>
    %c0_6 = arith.constant 0 : index
    %c0_7 = arith.constant 0 : index
    %c0_8 = arith.constant 0 : index
    %c0_9 = arith.constant 0 : index
    %10 = vector.load %arg3[%c0_6, %c0_7, %c0_8, %c0_9] : memref<2x3x8x128xf32, #tpu.memory_space<vmem>>, vector<2x3x8x128xf32>
    %c0_10 = arith.constant 0 : index
    %c0_11 = arith.constant 0 : index
    %c0_12 = arith.constant 0 : index
    %c0_13 = arith.constant 0 : index
    %11 = vector.load %arg4[%c0_10, %c0_11, %c0_12, %c0_13] : memref<2x3x8x128xf32, #tpu.memory_space<vmem>>, vector<2x3x8x128xf32>
    %12 = arith.subf %10, %11 : vector<2x3x8x128xf32>
    %13 = math.absf %12 : vector<2x3x8x128xf32>
    %14 = vector.broadcast %9 : vector<2x1x8x128xf32> to vector<2x3x8x128xf32>
    %15 = arith.mulf %13, %14 : vector<2x3x8x128xf32>
    %16 = vector.shape_cast %15 : vector<2x3x8x128xf32> to vector<6x8x128xf32>
    %cst_14 = arith.constant dense<0.000000e+00> : vector<8x128xf32>
    %17 = vector.multi_reduction <add>, %16, %cst_14 [0] : vector<6x8x128xf32> to vector<8x128xf32>
    %c0_15 = arith.constant 0 : index
    %c0_16 = arith.constant 0 : index
    %c0_17 = arith.constant 0 : index
    %c0_18 = arith.constant 0 : index
    %18 = vector.load %arg5[%c0_15, %c0_16, %c0_17, %c0_18] : memref<1x1x8x128xf32, #tpu.memory_space<vmem>>, vector<1x1x8x128xf32>
    %19 = vector.shape_cast %18 : vector<1x1x8x128xf32> to vector<8x128xf32>
    %20 = vector.shape_cast %17 : vector<8x128xf32> to vector<1x1x8x128xf32>
    tpu.vector_store %arg5[%c0_15, %c0_16, %c0_17, %c0_18], %20 {strides = array<i32>} : memref<1x1x8x128xf32, #tpu.memory_space<vmem>>, vector<1x1x8x128xf32>,
    return
  }
  func.func @transform_0(%arg0: i32, %arg1: i32) -> (i32, i32, i32, i32) {
    %c0_i32 = arith.constant 0 : i32
    %c0_i32_0 = arith.constant 0 : i32
    %c0_i32_1 = arith.constant 0 : i32
    return %arg0, %c0_i32, %arg1, %c0_i32_0 : i32, i32, i32, i32
  }
  func.func @transform_1(%arg0: i32, %arg1: i32) -> (i32, i32, i32, i32) {
    %c0_i32 = arith.constant 0 : i32
    %c0_i32_0 = arith.constant 0 : i32
    %c0_i32_1 = arith.constant 0 : i32
    return %arg0, %c0_i32, %arg1, %c0_i32_0 : i32, i32, i32, i32
  }
  func.func @transform_2(%arg0: i32, %arg1: i32) -> (i32, i32, i32, i32) {
    %c0_i32 = arith.constant 0 : i32
    %c0_i32_0 = arith.constant 0 : i32
    %c0_i32_1 = arith.constant 0 : i32
    return %arg0, %c0_i32, %arg1, %c0_i32_0 : i32, i32, i32, i32
  }
  func.func @transform_3(%arg0: i32, %arg1: i32) -> (i32, i32, i32, i32) {
    %c0_i32 = arith.constant 0 : i32
    %c0_i32_0 = arith.constant 0 : i32
    %c0_i32_1 = arith.constant 0 : i32
    return %arg0, %arg1, %c0_i32, %c0_i32_0 : i32, i32, i32, i32
  }
}

</mosaic_0001>

<llo_original>
// kernel: tpu_custom_call.1
$region0: #{tpu_custom_call.1}
  #allocation0 [shape = 'u32[]', space=smem, size = 0x4, offset = 0x4, fixed_abs, tag = 'smem constant byte address 0x4 - core index']
  #allocation1 [shape = 'u32[144,128]{1,0:T(1,128)}', space=vmem, size = 0x12000, scoped, tag = 'internal scratch']
  %s0 = inlined_call_operand.hbm [shape: f32[2,4,8,128], index: 0, kind: input, shape index: {}]
  %s1 = inlined_call_operand.hbm [shape: f32[2,3,8,128], index: 1, kind: input, shape index: {}]
  %s2 = inlined_call_operand.hbm [shape: f32[2,3,8,128], index: 2, kind: input, shape index: {}]
  %s3 = inlined_call_operand.hbm [shape: f32[1,1,8,128], index: 3, kind: output, shape index: {}]
  %s4 = sld [smem:[#allocation0]]
  $region34: #{tpu_custom_call.1} parent=0
    _
  %s6 = ssub.s32 1, %s4
  %s7 = scalar_select 0, %s6, %s4
  $region1: #{tpu_custom_call.1} parent=0
    #allocation2 [shape = 'u8[32768]{0}', space=vmem, size = 0x8000, scoped, tag = 'input window, operand 0, single buffered']
    #allocation3 [shape = 's32[1]{0}', space=sflag, size = 0x4, scoped, tag = 'scoped memory for tpu_custom_call.1']
    #allocation4 [shape = 's32[1]{0}', space=sflag, size = 0x4, scoped, tag = 'scoped memory for tpu_custom_call.1']
    #allocation5 [shape = 'u8[24576]{0}', space=vmem, size = 0x6000, scoped, tag = 'input window, operand 1, single buffered']
    #allocation6 [shape = 's32[1]{0}', space=sflag, size = 0x4, scoped, tag = 'scoped memory for tpu_custom_call.1']
    #allocation7 [shape = 'u8[24576]{0}', space=vmem, size = 0x6000, scoped, tag = 'input window, operand 2, single buffered']
    #allocation8 [shape = 'u8[4096]{0}', space=vmem, size = 0x1000, scoped, tag = 'output window, operand 0, single buffered']
    %8 = vsyncpa [#allocation3], 0
    %9 = vsyncpa [#allocation6], 0
    %10 = vsyncpa [#allocation4], 0
    // Predicated region
    $region2: #{tpu_custom_call.1} parent=1 // pred_check
      _
    $region3: #{tpu_custom_call.1} parent=1 // pred_check_branch
      %12 = sbr.rel (0) target = $region5
    $region4: #{tpu_custom_call.1} parent=1 // pred_region
      %s14 = ssub.s32 1024, 1024
      %15 = vsyncadd [#allocation3], %s14
      %s16 = sshll.u32 [#allocation2], 4
      %s17 = int_to_ptr.vmem [resolvable:$true] %s16
      %22 = dma.hbm_to_vmem [thread:$0]  %s0, 1024, %s17, [#allocation3], 128, 128, 8
    $region5: #{tpu_custom_call.1} parent=1 // pred_fallthru
      _
    // Predicated region
    $region6: #{tpu_custom_call.1} parent=1 // pred_check
      _
    $region7: #{tpu_custom_call.1} parent=1 // pred_check_branch
      %24 = sbr.rel (0) target = $region9
    $region8: #{tpu_custom_call.1} parent=1 // pred_region
      %s26 = ssub.s32 768, 768
      %27 = vsyncadd [#allocation6], %s26
      %s28 = sshll.u32 [#allocation5], 4
      %s29 = int_to_ptr.vmem [resolvable:$true] %s28
      %34 = dma.hbm_to_vmem [thread:$0]  %s1, 768, %s29, [#allocation6], 128, 128, 8
    $region9: #{tpu_custom_call.1} parent=1 // pred_fallthru
      _
    // Predicated region
    $region10: #{tpu_custom_call.1} parent=1 // pred_check
      _
    $region11: #{tpu_custom_call.1} parent=1 // pred_check_branch
      %36 = sbr.rel (0) target = $region13
    $region12: #{tpu_custom_call.1} parent=1 // pred_region
      %s38 = ssub.s32 768, 768
      %39 = vsyncadd [#allocation6], %s38
      %s40 = sshll.u32 [#allocation7], 4
      %s41 = int_to_ptr.vmem [resolvable:$true] %s40
      %46 = dma.hbm_to_vmem [thread:$0]  %s2, 768, %s41, [#allocation6], 128, 128, 8
    $region13: #{tpu_custom_call.1} parent=1 // pred_fallthru
      _
    // Predicated region
    $region14: #{tpu_custom_call.1} parent=1 // pred_check
      _
    $region15: #{tpu_custom_call.1} parent=1 // pred_check_branch
      %48 = sbr.rel (0) target = $region17
    $region16: #{tpu_custom_call.1} parent=1 // pred_region
      %49 = dma.done [#allocation3], 1024
    $region17: #{tpu_custom_call.1} parent=1 // pred_fallthru
      _
    // Predicated region
    $region18: #{tpu_custom_call.1} parent=1 // pred_check
      _
    $region19: #{tpu_custom_call.1} parent=1 // pred_check_branch
      %51 = sbr.rel (0) target = $region21
    $region20: #{tpu_custom_call.1} parent=1 // pred_region
      %52 = dma.done [#allocation6], 768
    $region21: #{tpu_custom_call.1} parent=1 // pred_fallthru
      _
    // Predicated region
    $region22: #{tpu_custom_call.1} parent=1 // pred_check
      _
    $region23: #{tpu_custom_call.1} parent=1 // pred_check_branch
      %54 = sbr.rel (0) target = $region25
    $region24: #{tpu_custom_call.1} parent=1 // pred_region
      %55 = dma.done [#allocation6], 768
    $region25: #{tpu_custom_call.1} parent=1 // pred_fallthru
      _
    %v56 = vld [vmem:[#allocation2] sm:$0xff]
    %v57 = vld [vmem:[#allocation2 + $0x8] sm:$0xff]
    %v58 = vld [vmem:[#allocation2 + $0x10] sm:$0xff]
    %v59 = vld [vmem:[#allocation2 + $0x18] sm:$0xff]
    %v60 = vld [vmem:[#allocation2 + $0x20] sm:$0xff]
    %v61 = vld [vmem:[#allocation2 + $0x28] sm:$0xff]
    %v62 = vld [vmem:[#allocation2 + $0x30] sm:$0xff]
    %v63 = vld [vmem:[#allocation2 + $0x38] sm:$0xff]
    %v64 = vsub.f32 %v56, 0.5
    %v65 = vsub.f32 %v57, 0.5
    %v66 = vsub.f32 %v58, 0.5
    %v67 = vsub.f32 %v59, 0.5
    %v68 = vsub.f32 %v60, 0.5
    %v69 = vsub.f32 %v61, 0.5
    %v70 = vsub.f32 %v62, 0.5
    %v71 = vsub.f32 %v63, 0.5
    %v72 = vand.u32 2147483647, %v64
    %v73 = vand.u32 2147483647, %v65
    %v74 = vand.u32 2147483647, %v66
    %v75 = vand.u32 2147483647, %v67
    %v76 = vand.u32 2147483647, %v68
    %v77 = vand.u32 2147483647, %v69
    %v78 = vand.u32 2147483647, %v70
    %v79 = vand.u32 2147483647, %v71
    %v80 = vadd.f32 %v72, %v73
    %v81 = vadd.f32 %v80, %v74
    %v82 = vadd.f32 %v81, %v75
    %v83 = vadd.f32 %v76, %v77
    %v84 = vadd.f32 %v83, %v78
    %v85 = vadd.f32 %v84, %v79
    %v86 = vmul.f32 %v82, 0.5
    %v87 = vmul.f32 %v85, 0.5
    %v88 = vadd.f32 %v86, 0.2
    %v89 = vadd.f32 %v87, 0.2
    %v90 = vld [vmem:[#allocation5] sm:$0xff]
    %v91 = vld [vmem:[#allocation5 + $0x8] sm:$0xff]
    %v92 = vld [vmem:[#allocation5 + $0x10] sm:$0xff]
    %v93 = vld [vmem:[#allocation5 + $0x18] sm:$0xff]
    %v94 = vld [vmem:[#allocation5 + $0x20] sm:$0xff]
    %v95 = vld [vmem:[#allocation5 + $0x28] sm:$0xff]
    %v96 = vld [vmem:[#allocation7] sm:$0xff]
    %v97 = vld [vmem:[#allocation7 + $0x8] sm:$0xff]
    %v98 = vld [vmem:[#allocation7 + $0x10] sm:$0xff]
    %v99 = vld [vmem:[#allocation7 + $0x18] sm:$0xff]
    %v100 = vld [vmem:[#allocation7 + $0x20] sm:$0xff]
    %v101 = vld [vmem:[#allocation7 + $0x28] sm:$0xff]
    %v102 = vsub.f32 %v90, %v96
    %v103 = vsub.f32 %v91, %v97
    %v104 = vsub.f32 %v92, %v98
    %v105 = vsub.f32 %v93, %v99
    %v106 = vsub.f32 %v94, %v100
    %v107 = vsub.f32 %v95, %v101
    %v108 = vand.u32 2147483647, %v102
    %v109 = vand.u32 2147483647, %v103
    %v110 = vand.u32 2147483647, %v104
    %v111 = vand.u32 2147483647, %v105
    %v112 = vand.u32 2147483647, %v106
    %v113 = vand.u32 2147483647, %v107
    %v114 = vmul.f32 %v108, %v88
    %v115 = vmul.f32 %v109, %v88
    %v116 = vmul.f32 %v110, %v88
    %v117 = vmul.f32 %v111, %v89
    %v118 = vmul.f32 %v112, %v89
    %v119 = vmul.f32 %v113, %v89
    %v120 = vadd.f32 %v114, %v115
    %v121 = vadd.f32 %v120, %v116
    %v122 = vadd.f32 %v121, %v117
    %v123 = vadd.f32 %v122, %v118
    %v124 = vadd.f32 %v123, %v119
    %125 = vst [vmem:[#allocation8] sm:$0xff] %v124
    // Predicated region
    $region26: #{tpu_custom_call.1} parent=1 // pred_check
      _
    $region27: #{tpu_custom_call.1} parent=1 // pred_check_branch
      %127 = sbr.rel (0) target = $region29
    $region28: #{tpu_custom_call.1} parent=1 // pred_region
      %s129 = ssub.s32 128, 128
      %130 = vsyncadd [#allocation4], %s129
      %s132 = sshll.u32 [#allocation8], 4
      %s133 = int_to_ptr.vmem [resolvable:$true] %s132
      %135 = dma.vmem_to_hbm [thread:$0]  %s133, 128, %s3, [#allocation4]
    $region29: #{tpu_custom_call.1} parent=1 // pred_fallthru
      _
    // Predicated region
    $region30: #{tpu_custom_call.1} parent=1 // pred_check
      _
    $region31: #{tpu_custom_call.1} parent=1 // pred_check_branch
      %137 = sbr.rel (0) target = $region33
    $region32: #{tpu_custom_call.1} parent=1 // pred_region
      %138 = dma.done [#allocation4], 128
    $region33: #{tpu_custom_call.1} parent=1 // pred_fallthru
      _
    %139 = vsyncpa [#allocation3], 1
    %140 = vsyncpa [#allocation6], 1
    %141 = vsyncpa [#allocation4], 1

</llo_original>
